<compile_context>
chip_gen: v7x
topology: tpu7x:2x2x1
jax: 0.10.0
libtpu: 0.0.40
codegen_flags: <defaults>
</compile_context>

<pallas_src>
import math
import functools

import jax
import jax.numpy as jnp
from jax.experimental import pallas as pl
from jax.experimental.pallas import tpu as pltpu


# ---- static configuration ---------------------------------------------------
P = 4                                   # tokens packed per output row -> P*D = 128 lanes
WEEKDAY_SIZE = 7
DAY_SIZE = 32
MONTH_SIZE = 13
V_CAT = WEEKDAY_SIZE + DAY_SIZE + MONTH_SIZE     # 52 rows: [wk; day; mon]
KV = 256                                # K padded to whole vregs (P*52=208 -> 256)
# per-field base offsets into the concatenated table, in input column order
# (x[..., 0]=month -> rows 39..51, x[..., 1]=day -> 7..38, x[..., 2]=weekday -> 0..6)
_FIELD_OFF = (WEEKDAY_SIZE + DAY_SIZE, WEEKDAY_SIZE, 0)
# static offset for each of the P*3 packed index columns (token slot q, field f)
_COL_OFFSETS = tuple(q * V_CAT + _FIELD_OFF[f] for q in range(P) for f in range(3))


def fixed_embedding_table(c_in: int, d_model: int) -> jnp.ndarray:
    """Deterministic sinusoidal table, identical to FixedEmbedding.__init__."""
    position = jnp.arange(c_in, dtype=jnp.float32)[:, None]              # (c_in, 1)
    div_term = jnp.exp(
        jnp.arange(0, d_model, 2, dtype=jnp.float32)
        * -(math.log(10000.0) / d_model)
    )                                                                    # (ceil(D/2),)
    w = jnp.zeros((c_in, d_model), dtype=jnp.float32)
    w = w.at[:, 0::2].set((jnp.sin(position * div_term))[:, : (d_model + 1) // 2])
    w = w.at[:, 1::2].set((jnp.cos(position * div_term))[:, : d_model // 2])
    return w


def build_packed_table(wk_tab, day_tab, mon_tab, p: int = P, kv: int = KV) -> jnp.ndarray:
    """[wk; day; mon] -> (52, D), laid block-diagonally into a (KV=256, p*D) table.

    Rows 208..255 are zero padding (never addressed by any index), so the
    padded K contributes exactly 0 to the matmul.
    """
    cat = jnp.concatenate([wk_tab, day_tab, mon_tab], axis=0)            # (52, D)
    V, D = cat.shape
    assert p * V <= kv
    bd = jnp.zeros((kv, p * D), cat.dtype)
    for q in range(p):
        bd = bd.at[q * V:(q + 1) * V, q * D:(q + 1) * D].set(cat)
    return bd                                                            # (256, 128)


def _temporal_emb_kernel(idx_ref, tab_ref, out_ref):
    # idx_ref: (rows_tile, P*3) int32 -- raw [mon, day, wk] indices, P tokens/row.
    # tab_ref: (KV, P*D) f32 block-diagonal table, resident in VMEM across steps.
    # out_ref: (rows_tile, P*D) f32 -- lane-dense (128-wide) output rows.
    idx = idx_ref[...]
    rows = idx.shape[0]
    kdim = tab_ref.shape[0]

    lanes = jax.lax.broadcasted_iota(jnp.int32, (rows, kdim), 1)

    # The 12 compares hit provably disjoint lanes (distinct field ranges inside
    # distinct diagonal blocks), so OR-ing the boolean masks and casting ONCE
    # is exact and much cheaper on the binding VALU slot than 12x (cast + add).
    # Field/block offsets are static constants -> added to the narrow (rows,1)
    # index column, not to the wide lane tensor.
    mask = None
    for j, off in enumerate(_COL_OFFSETS):
        hit = (idx[:, j:j + 1] + off) == lanes
        mask = hit if mask is None else jnp.logical_or(mask, hit)
    multi_hot = mask.astype(jnp.float32)

    # One MXU matmul performs all three lookups AND the wk+day+mon sum, and
    # packs P tokens into each 128-lane output row.  Precision pinned so the
    # f32 x f32 path cannot silently degrade to single-pass bf16.
    out_ref[...] = jnp.dot(
        multi_hot,
        tab_ref[...],
        preferred_element_type=jnp.float32,
        precision=jax.lax.Precision.HIGHEST,
    )


def _round_up(a: int, b: int) -> int:
    return (a + b - 1) // b * b


@functools.partial(jax.jit, static_argnames=("tn",))
def temporal_embedding(x, packed_table, *, tn: int = 8192):
    """x: (B, T, F>=3) integer array. packed_table: (KV, P*D). Returns (B, T, D) f32."""
    B, T, F = x.shape
    KVt, PD = packed_table.shape
    D = PD // P
    N = B * T
    ALIGN = P * 8                      # 32 tokens = P packed rows x 8 sublanes

    # Tile as large as possible to amortize grid-step overhead, but keep >= 2
    # grid steps when there is enough work so the "parallel" axis can shard
    # across both TensorCores on v7x (no-op on v5e/v6e).
    n_min = _round_up(N, ALIGN)
    tn_eff = min(_round_up(tn, ALIGN), n_min)
    if n_min >= 2 * ALIGN and n_min <= tn_eff:
        tn_eff = _round_up(pl.cdiv(n_min, 2), ALIGN)
    tn_eff = max(tn_eff, ALIGN)
    n_pad = _round_up(N, tn_eff)

    # Raw [month, day, weekday] indices only -- field offsets and per-slot
    # block shifts are applied inside the kernel, so index HBM traffic is just
    # 12 B/token.  Padded tail tokens map to index 0 (valid) and are discarded.
    idx = x.reshape(N, F)[:, :3].astype(jnp.int32)
    idx = jnp.pad(idx, ((0, n_pad - N), (0, 0)))
    rows = n_pad // P
    idx = idx.reshape(rows, P * 3)

    rows_tile = tn_eff // P
    out = pl.pallas_call(
        _temporal_emb_kernel,
        out_shape=jax.ShapeDtypeStruct((rows, PD), jnp.float32),
        grid=(rows // rows_tile,),
        in_specs=[
            pl.BlockSpec((rows_tile, P * 3), lambda i: (i, 0)),
            pl.BlockSpec((KVt, PD), lambda i: (0, 0)),        # table stays resident
        ],
        out_specs=pl.BlockSpec((rows_tile, PD), lambda i: (i, 0)),
        compiler_params=pltpu.CompilerParams(
            dimension_semantics=("parallel",),
            # tn=8192 -> ~5 MiB (2x 1 MiB output buffers + ~2 MiB multi-hot
            # scratch + 128 KiB table + indices); fits the 32 MiB scoped
            # default and v7x's 64 MiB physical VMEM with large margin.
            vmem_limit_bytes=32 * 1024 * 1024,
        ),
    )(idx, packed_table)

    return out.reshape(n_pad, D)[:N].reshape(B, T, D)


if __name__ == "__main__":
    # module config
    embedding_size = 32

    # deterministic fixed tables (embed_type='fixed')
    wk_tab = fixed_embedding_table(WEEKDAY_SIZE, embedding_size)
    day_tab = fixed_embedding_table(DAY_SIZE, embedding_size)
    mon_tab = fixed_embedding_table(MONTH_SIZE, embedding_size)
    packed_table = build_packed_table(wk_tab, day_tab, mon_tab)          # (256, 128)

    # small example input: (B=2, T=8, F=3) with [month, day, weekday] indices
    key = jax.random.PRNGKey(0)
    k0, k1, k2 = jax.random.split(key, 3)
    B, T = 2, 8
    month = jax.random.randint(k0, (B, T, 1), 0, MONTH_SIZE)
    day = jax.random.randint(k1, (B, T, 1), 0, DAY_SIZE)
    weekday = jax.random.randint(k2, (B, T, 1), 0, WEEKDAY_SIZE)
    x = jnp.concatenate([month, day, weekday], axis=-1)                  # (B, T, 3) int32

    out = temporal_embedding(x, packed_table)
    out = jax.block_until_ready(out)

    # pure-JAX reference check (matches PyTorch: wk + day + mon, fp32)
    ref = (jnp.take(wk_tab, x[:, :, 2], axis=0)
           + jnp.take(day_tab, x[:, :, 1], axis=0)
           + jnp.take(mon_tab, x[:, :, 0], axis=0))
    assert out.shape == (B, T, embedding_size)
    assert jnp.allclose(out, ref, atol=1e-5, rtol=1e-5)

    print("KERNEL_OK")
</pallas_src>

<mosaic_0001>
module attributes {stable_mosaic.version = 11 : i64} {
  func.func @_temporal_emb_kernel(%arg0: i32, %arg1: memref<8x12xi32, #tpu.memory_space<vmem>>, %arg2: memref<256x128xf32, #tpu.memory_space<vmem>>, %arg3: memref<8x128xf32, #tpu.memory_space<vmem>>) attributes {dimension_semantics = [#tpu.dimension_semantics<parallel>], iteration_bounds = array<i64: 1>, scalar_prefetch = 0 : i64, scratch_operands = 0 : i64, tpu.core_type = #tpu.core_type<tc>, window_params = [{transform_indices = @transform_0, window_bounds = array<i64: 8, 12>}, {pipeline_mode = #tpu.pipeline_mode<synchronous>, transform_indices = @transform_1, window_bounds = array<i64: 256, 128>}, {transform_indices = @transform_2, window_bounds = array<i64: 8, 128>}]} {
    %c0 = arith.constant 0 : index
    %c0_0 = arith.constant 0 : index
    %0 = vector.load %arg1[%c0, %c0_0] : memref<8x12xi32, #tpu.memory_space<vmem>>, vector<8x12xi32>
    %1 = tpu.iota {dimensions = array<i32: 1>} : vector<8x256xi32>
    %2 = vector.extract_strided_slice %0 {offsets = [0, 0], sizes = [8, 1], strides = [1, 1]} : vector<8x12xi32> to vector<8x1xi32>
    %c39_i32 = arith.constant 39 : i32
    %3 = vector.broadcast %c39_i32 : i32 to vector<8x1xi32>
    %4 = arith.addi %2, %3 : vector<8x1xi32>
    %5 = vector.broadcast %4 : vector<8x1xi32> to vector<8x256xi32>
    %6 = arith.cmpi eq, %5, %1 : vector<8x256xi32>
    %7 = vector.extract_strided_slice %0 {offsets = [0, 1], sizes = [8, 1], strides = [1, 1]} : vector<8x12xi32> to vector<8x1xi32>
    %c7_i32 = arith.constant 7 : i32
    %8 = vector.broadcast %c7_i32 : i32 to vector<8x1xi32>
    %9 = arith.addi %7, %8 : vector<8x1xi32>
    %10 = vector.broadcast %9 : vector<8x1xi32> to vector<8x256xi32>
    %11 = arith.cmpi eq, %10, %1 : vector<8x256xi32>
    %12 = arith.ori %6, %11 : vector<8x256xi1>
    %13 = vector.extract_strided_slice %0 {offsets = [0, 2], sizes = [8, 1], strides = [1, 1]} : vector<8x12xi32> to vector<8x1xi32>
    %c0_i32 = arith.constant 0 : i32
    %14 = vector.broadcast %c0_i32 : i32 to vector<8x1xi32>
    %15 = arith.addi %13, %14 : vector<8x1xi32>
    %16 = vector.broadcast %15 : vector<8x1xi32> to vector<8x256xi32>
    %17 = arith.cmpi eq, %16, %1 : vector<8x256xi32>
    %18 = arith.ori %12, %17 : vector<8x256xi1>
    %19 = vector.extract_strided_slice %0 {offsets = [0, 3], sizes = [8, 1], strides = [1, 1]} : vector<8x12xi32> to vector<8x1xi32>
    %c91_i32 = arith.constant 91 : i32
    %20 = vector.broadcast %c91_i32 : i32 to vector<8x1xi32>
    %21 = arith.addi %19, %20 : vector<8x1xi32>
    %22 = vector.broadcast %21 : vector<8x1xi32> to vector<8x256xi32>
    %23 = arith.cmpi eq, %22, %1 : vector<8x256xi32>
    %24 = arith.ori %18, %23 : vector<8x256xi1>
    %25 = vector.extract_strided_slice %0 {offsets = [0, 4], sizes = [8, 1], strides = [1, 1]} : vector<8x12xi32> to vector<8x1xi32>
    %c59_i32 = arith.constant 59 : i32
    %26 = vector.broadcast %c59_i32 : i32 to vector<8x1xi32>
    %27 = arith.addi %25, %26 : vector<8x1xi32>
    %28 = vector.broadcast %27 : vector<8x1xi32> to vector<8x256xi32>
    %29 = arith.cmpi eq, %28, %1 : vector<8x256xi32>
    %30 = arith.ori %24, %29 : vector<8x256xi1>
    %31 = vector.extract_strided_slice %0 {offsets = [0, 5], sizes = [8, 1], strides = [1, 1]} : vector<8x12xi32> to vector<8x1xi32>
    %c52_i32 = arith.constant 52 : i32
    %32 = vector.broadcast %c52_i32 : i32 to vector<8x1xi32>
    %33 = arith.addi %31, %32 : vector<8x1xi32>
    %34 = vector.broadcast %33 : vector<8x1xi32> to vector<8x256xi32>
    %35 = arith.cmpi eq, %34, %1 : vector<8x256xi32>
    %36 = arith.ori %30, %35 : vector<8x256xi1>
    %37 = vector.extract_strided_slice %0 {offsets = [0, 6], sizes = [8, 1], strides = [1, 1]} : vector<8x12xi32> to vector<8x1xi32>
    %c143_i32 = arith.constant 143 : i32
    %38 = vector.broadcast %c143_i32 : i32 to vector<8x1xi32>
    %39 = arith.addi %37, %38 : vector<8x1xi32>
    %40 = vector.broadcast %39 : vector<8x1xi32> to vector<8x256xi32>
    %41 = arith.cmpi eq, %40, %1 : vector<8x256xi32>
    %42 = arith.ori %36, %41 : vector<8x256xi1>
    %43 = vector.extract_strided_slice %0 {offsets = [0, 7], sizes = [8, 1], strides = [1, 1]} : vector<8x12xi32> to vector<8x1xi32>
    %c111_i32 = arith.constant 111 : i32
    %44 = vector.broadcast %c111_i32 : i32 to vector<8x1xi32>
    %45 = arith.addi %43, %44 : vector<8x1xi32>
    %46 = vector.broadcast %45 : vector<8x1xi32> to vector<8x256xi32>
    %47 = arith.cmpi eq, %46, %1 : vector<8x256xi32>
    %48 = arith.ori %42, %47 : vector<8x256xi1>
    %49 = vector.extract_strided_slice %0 {offsets = [0, 8], sizes = [8, 1], strides = [1, 1]} : vector<8x12xi32> to vector<8x1xi32>
    %c104_i32 = arith.constant 104 : i32
    %50 = vector.broadcast %c104_i32 : i32 to vector<8x1xi32>
    %51 = arith.addi %49, %50 : vector<8x1xi32>
    %52 = vector.broadcast %51 : vector<8x1xi32> to vector<8x256xi32>
    %53 = arith.cmpi eq, %52, %1 : vector<8x256xi32>
    %54 = arith.ori %48, %53 : vector<8x256xi1>
    %55 = vector.extract_strided_slice %0 {offsets = [0, 9], sizes = [8, 1], strides = [1, 1]} : vector<8x12xi32> to vector<8x1xi32>
    %c195_i32 = arith.constant 195 : i32
    %56 = vector.broadcast %c195_i32 : i32 to vector<8x1xi32>
    %57 = arith.addi %55, %56 : vector<8x1xi32>
    %58 = vector.broadcast %57 : vector<8x1xi32> to vector<8x256xi32>
    %59 = arith.cmpi eq, %58, %1 : vector<8x256xi32>
    %60 = arith.ori %54, %59 : vector<8x256xi1>
    %61 = vector.extract_strided_slice %0 {offsets = [0, 10], sizes = [8, 1], strides = [1, 1]} : vector<8x12xi32> to vector<8x1xi32>
    %c163_i32 = arith.constant 163 : i32
    %62 = vector.broadcast %c163_i32 : i32 to vector<8x1xi32>
    %63 = arith.addi %61, %62 : vector<8x1xi32>
    %64 = vector.broadcast %63 : vector<8x1xi32> to vector<8x256xi32>
    %65 = arith.cmpi eq, %64, %1 : vector<8x256xi32>
    %66 = arith.ori %60, %65 : vector<8x256xi1>
    %67 = vector.extract_strided_slice %0 {offsets = [0, 11], sizes = [8, 1], strides = [1, 1]} : vector<8x12xi32> to vector<8x1xi32>
    %c156_i32 = arith.constant 156 : i32
    %68 = vector.broadcast %c156_i32 : i32 to vector<8x1xi32>
    %69 = arith.addi %67, %68 : vector<8x1xi32>
    %70 = vector.broadcast %69 : vector<8x1xi32> to vector<8x256xi32>
    %71 = arith.cmpi eq, %70, %1 : vector<8x256xi32>
    %72 = arith.ori %66, %71 : vector<8x256xi1>
    %73 = arith.extui %72 : vector<8x256xi1> to vector<8x256xi32>
    %74 = arith.sitofp %73 : vector<8x256xi32> to vector<8x256xf32>
    %c0_1 = arith.constant 0 : index
    %c0_2 = arith.constant 0 : index
    %75 = vector.load %arg2[%c0_1, %c0_2] : memref<256x128xf32, #tpu.memory_space<vmem>>, vector<256x128xf32>
    %cst = arith.constant dense<0.000000e+00> : vector<8x128xf32>
    %76 = tpu.matmul %74, %75, %cst {dimension_numbers = #tpu.dot_dimension_numbers<[1], [0], [0], [1], [0, 0, 1, 1], [], []>, precision = #tpu.contract_precision<fp32>} : vector<8x256xf32>, vector<256x128xf32>, vector<8x128xf32> -> vector<8x128xf32>
    %c0_3 = arith.constant 0 : index
    %c0_4 = arith.constant 0 : index
    %77 = vector.load %arg3[%c0_3, %c0_4] : memref<8x128xf32, #tpu.memory_space<vmem>>, vector<8x128xf32>
    tpu.vector_store %arg3[%c0_3, %c0_4], %76 {strides = array<i32>} : memref<8x128xf32, #tpu.memory_space<vmem>>, vector<8x128xf32>,
    return
  }
  func.func @transform_0(%arg0: i32) -> (i32, i32) {
    %c0_i32 = arith.constant 0 : i32
    %c0_i32_0 = arith.constant 0 : i32
    return %arg0, %c0_i32 : i32, i32
  }
  func.func @transform_1(%arg0: i32) -> (i32, i32) {
    %c0_i32 = arith.constant 0 : i32
    %c0_i32_0 = arith.constant 0 : i32
    %c0_i32_1 = arith.constant 0 : i32
    return %c0_i32, %c0_i32_0 : i32, i32
  }
  func.func @transform_2(%arg0: i32) -> (i32, i32) {
    %c0_i32 = arith.constant 0 : i32
    %c0_i32_0 = arith.constant 0 : i32
    return %arg0, %c0_i32 : i32, i32
  }
}

</mosaic_0001>

<llo_original>
// kernel: temporal_embedding.1
$region0: #{temporal_embedding.1}
  #allocation0 [shape = 'u32[]', space=smem, size = 0x4, offset = 0x4, fixed_abs, tag = 'smem constant byte address 0x4 - core index']
  #allocation1 [shape = 'u32[144,128]{1,0:T(1,128)}', space=vmem, size = 0x12000, scoped, tag = 'internal scratch']
  %s0 = inlined_call_operand.vmem [shape: s32[8,12], index: 0, kind: input, shape index: {}]
  %s1 = inlined_call_operand.hbm [shape: f32[256,128], index: 1, kind: input, shape index: {}]
  %s2 = inlined_call_operand.vmem [shape: f32[8,128], index: 2, kind: output, shape index: {}]
  %s3 = sld [smem:[#allocation0]]
  $region22: #{temporal_embedding.1} parent=0
    _
  %s5 = ssub.s32 1, %s3
  %s6 = scalar_select 0, %s5, %s3
  $region1: #{temporal_embedding.1} parent=0
    #allocation2 [shape = 'u8[131072]{0}', space=vmem, size = 0x20000, scoped, tag = 'input window, operand 1, single buffered']
    #allocation3 [shape = 's32[1]{0}', space=sflag, size = 0x4, scoped, tag = 'scoped memory for temporal_embedding.1']
    %7 = vsyncpa [#allocation3], 0
    // Predicated region
    $region2: #{temporal_embedding.1} parent=1 // pred_check
      _
    $region3: #{temporal_embedding.1} parent=1 // pred_check_branch
      %9 = sbr.rel (0) target = $region5
    $region4: #{temporal_embedding.1} parent=1 // pred_region
      _
    $region5: #{temporal_embedding.1} parent=1 // pred_fallthru
      _
    // Predicated region
    $region6: #{temporal_embedding.1} parent=1 // pred_check
      _
    $region7: #{temporal_embedding.1} parent=1 // pred_check_branch
      %11 = sbr.rel (0) target = $region9
    $region8: #{temporal_embedding.1} parent=1 // pred_region
      %s13 = ssub.s32 4096, 4096
      %14 = vsyncadd [#allocation3], %s13
      %s15 = sshll.u32 [#allocation2], 4
      %s16 = int_to_ptr.vmem [resolvable:$true] %s15
      %21 = dma.hbm_to_vmem [thread:$0]  %s1, 4096, %s16, [#allocation3], 128, 128, 8
    $region9: #{temporal_embedding.1} parent=1 // pred_fallthru
      _
    // Predicated region
    $region10: #{temporal_embedding.1} parent=1 // pred_check
      _
    $region11: #{temporal_embedding.1} parent=1 // pred_check_branch
      %23 = sbr.rel (0) target = $region13
    $region12: #{temporal_embedding.1} parent=1 // pred_region
      %24 = dma.done [#allocation3], 4096
    $region13: #{temporal_embedding.1} parent=1 // pred_fallthru
      _
    %v25 = vld [vmem:[%s0] sm:$0xff]
    %v26 = vlaneseq
    %v27 = vand.u32 %v26, 127
    %v28 = vadd.s32 %v27, 128
    %v29 = vadd.s32 %v25, 39
    %30 = vset.pattern.permute.xlu0 0
    %31 = vperm.xlu0 %30, %v29
    %v32 = vpop.permute.xlu0 %31
    %vm33 = vcmp.eq.s32.totalorder %v32, %v27
    %vm34 = vcmp.eq.s32.totalorder %v32, %v28
    %v35 = vadd.s32 %v25, 7
    %36 = vset.pattern.permute.xlu0 1
    %37 = vperm.xlu0 %36, %v35
    %v38 = vpop.permute.xlu0 %37
    %vm39 = vcmp.eq.s32.totalorder %v38, %v27
    %vm40 = vcmp.eq.s32.totalorder %v38, %v28
    %vm41 = vmor %vm33, %vm39
    %vm42 = vmor %vm34, %vm40
    %43 = vset.pattern.permute.xlu0 2
    %44 = vperm.xlu0 %43, %v25
    %v45 = vpop.permute.xlu0 %44
    %vm46 = vcmp.eq.s32.totalorder %v45, %v27
    %vm47 = vcmp.eq.s32.totalorder %v45, %v28
    %vm48 = vmor %vm41, %vm46
    %vm49 = vmor %vm42, %vm47
    %v50 = vadd.s32 %v25, 91
    %51 = vset.pattern.permute.xlu0 3
    %52 = vperm.xlu0 %51, %v50
    %v53 = vpop.permute.xlu0 %52
    %vm54 = vcmp.eq.s32.totalorder %v53, %v27
    %vm55 = vcmp.eq.s32.totalorder %v53, %v28
    %vm56 = vmor %vm48, %vm54
    %vm57 = vmor %vm49, %vm55
    %v58 = vadd.s32 %v25, 59
    %59 = vset.pattern.permute.xlu0 4
    %60 = vperm.xlu0 %59, %v58
    %v61 = vpop.permute.xlu0 %60
    %vm62 = vcmp.eq.s32.totalorder %v61, %v27
    %vm63 = vcmp.eq.s32.totalorder %v61, %v28
    %vm64 = vmor %vm56, %vm62
    %vm65 = vmor %vm57, %vm63
    %v66 = vadd.s32 %v25, 52
    %67 = vset.pattern.permute.xlu0 5
    %68 = vperm.xlu0 %67, %v66
    %v69 = vpop.permute.xlu0 %68
    %vm70 = vcmp.eq.s32.totalorder %v69, %v27
    %vm71 = vcmp.eq.s32.totalorder %v69, %v28
    %vm72 = vmor %vm64, %vm70
    %vm73 = vmor %vm65, %vm71
    %v74 = vadd.s32 %v25, 143
    %75 = vset.pattern.permute.xlu0 6
    %76 = vperm.xlu0 %75, %v74
    %v77 = vpop.permute.xlu0 %76
    %vm78 = vcmp.eq.s32.totalorder %v77, %v27
    %vm79 = vcmp.eq.s32.totalorder %v77, %v28
    %vm80 = vmor %vm72, %vm78
    %vm81 = vmor %vm73, %vm79
    %v82 = vadd.s32 %v25, 111
    %83 = vset.pattern.permute.xlu0 7
    %84 = vperm.xlu0 %83, %v82
    %v85 = vpop.permute.xlu0 %84
    %vm86 = vcmp.eq.s32.totalorder %v85, %v27
    %vm87 = vcmp.eq.s32.totalorder %v85, %v28
    %vm88 = vmor %vm80, %vm86
    %vm89 = vmor %vm81, %vm87
    %v90 = vadd.s32 %v25, 104
    %91 = vset.pattern.permute.xlu0 8
    %92 = vperm.xlu0 %91, %v90
    %v93 = vpop.permute.xlu0 %92
    %vm94 = vcmp.eq.s32.totalorder %v93, %v27
    %vm95 = vcmp.eq.s32.totalorder %v93, %v28
    %vm96 = vmor %vm88, %vm94
    %vm97 = vmor %vm89, %vm95
    %v98 = vadd.s32 %v25, 195
    %99 = vset.pattern.permute.xlu0 9
    %100 = vperm.xlu0 %99, %v98
    %v101 = vpop.permute.xlu0 %100
    %vm102 = vcmp.eq.s32.totalorder %v101, %v27
    %vm103 = vcmp.eq.s32.totalorder %v101, %v28
    %vm104 = vmor %vm96, %vm102
    %vm105 = vmor %vm97, %vm103
    %v106 = vadd.s32 %v25, 163
    %107 = vset.pattern.permute.xlu0 10
    %108 = vperm.xlu0 %107, %v106
    %v109 = vpop.permute.xlu0 %108
    %vm110 = vcmp.eq.s32.totalorder %v109, %v27
    %vm111 = vcmp.eq.s32.totalorder %v109, %v28
    %vm112 = vmor %vm104, %vm110
    %vm113 = vmor %vm105, %vm111
    %v114 = vadd.s32 %v25, 156
    %115 = vset.pattern.permute.xlu0 11
    %116 = vperm.xlu0 %115, %v114
    %v117 = vpop.permute.xlu0 %116
    %vm118 = vcmp.eq.s32.totalorder %v117, %v27
    %vm119 = vcmp.eq.s32.totalorder %v117, %v28
    %vm120 = vmor %vm112, %vm118
    %vm121 = vmor %vm113, %vm119
    %v122 = vsel %vm120, 1, 0
    %v123 = vsel %vm121, 1, 0
    %v124 = vcvt.s32.f32 %v122
    %v125 = vcvt.s32.f32 %v123
    %v126 = vld [vmem:[#allocation2] sm:$0xff]
    %v127 = vld [vmem:[#allocation2 + $0x8] sm:$0xff]
    %v128 = vld [vmem:[#allocation2 + $0x10] sm:$0xff]
    %v129 = vld [vmem:[#allocation2 + $0x18] sm:$0xff]
    %v130 = vld [vmem:[#allocation2 + $0x20] sm:$0xff]
    %v131 = vld [vmem:[#allocation2 + $0x28] sm:$0xff]
    %v132 = vld [vmem:[#allocation2 + $0x30] sm:$0xff]
    %v133 = vld [vmem:[#allocation2 + $0x38] sm:$0xff]
    %v134 = vld [vmem:[#allocation2 + $0x40] sm:$0xff]
    %v135 = vld [vmem:[#allocation2 + $0x48] sm:$0xff]
    %v136 = vld [vmem:[#allocation2 + $0x50] sm:$0xff]
    %v137 = vld [vmem:[#allocation2 + $0x58] sm:$0xff]
    %v138 = vld [vmem:[#allocation2 + $0x60] sm:$0xff]
    %v139 = vld [vmem:[#allocation2 + $0x68] sm:$0xff]
    %v140 = vld [vmem:[#allocation2 + $0x70] sm:$0xff]
    %v141 = vld [vmem:[#allocation2 + $0x78] sm:$0xff]
    %v142 = vld [vmem:[#allocation2 + $0x80] sm:$0xff]
    %v143 = vld [vmem:[#allocation2 + $0x88] sm:$0xff]
    %v144 = vld [vmem:[#allocation2 + $0x90] sm:$0xff]
    %v145 = vld [vmem:[#allocation2 + $0x98] sm:$0xff]
    %v146 = vld [vmem:[#allocation2 + $0xa0] sm:$0xff]
    %v147 = vld [vmem:[#allocation2 + $0xa8] sm:$0xff]
    %v148 = vld [vmem:[#allocation2 + $0xb0] sm:$0xff]
    %v149 = vld [vmem:[#allocation2 + $0xb8] sm:$0xff]
    %v150 = vld [vmem:[#allocation2 + $0xc0] sm:$0xff]
    %v151 = vld [vmem:[#allocation2 + $0xc8] sm:$0xff]
    %v152 = vld [vmem:[#allocation2 + $0xd0] sm:$0xff]
    %v153 = vld [vmem:[#allocation2 + $0xd8] sm:$0xff]
    %v154 = vld [vmem:[#allocation2 + $0xe0] sm:$0xff]
    %v155 = vld [vmem:[#allocation2 + $0xe8] sm:$0xff]
    %v156 = vld [vmem:[#allocation2 + $0xf0] sm:$0xff]
    %v157 = vld [vmem:[#allocation2 + $0xf8] sm:$0xff]
    %158 = vmatprep.subr.mxu0 0.0
    %v159 = vand.u32 %v126, 4294901760
    %160 = vmatpush1.msra.mxu0 %v159
    %161 = vmatprep.subr.mxu0 0.0
    %v162 = vand.u32 %v127, 4294901760
    %163 = vmatpush1.msra.mxu0 %v162
    %164 = vmatprep.subr.mxu0 0.0
    %v165 = vand.u32 %v128, 4294901760
    %166 = vmatpush1.msra.mxu0 %v165
    %167 = vmatprep.subr.mxu0 0.0
    %v168 = vand.u32 %v129, 4294901760
    %169 = vmatpush1.msra.mxu0 %v168
    %170 = vmatprep.subr.mxu0 0.0
    %v171 = vand.u32 %v130, 4294901760
    %172 = vmatpush1.msra.mxu0 %v171
    %173 = vmatprep.subr.mxu0 0.0
    %v174 = vand.u32 %v131, 4294901760
    %175 = vmatpush1.msra.mxu0 %v174
    %176 = vmatprep.subr.mxu0 0.0
    %v177 = vand.u32 %v132, 4294901760
    %178 = vmatpush1.msra.mxu0 %v177
    %179 = vmatprep.subr.mxu0 0.0
    %v180 = vand.u32 %v133, 4294901760
    %181 = vmatpush1.msra.mxu0 %v180
    %182 = vmatprep.subr.mxu0 0.0
    %v183 = vand.u32 %v134, 4294901760
    %184 = vmatpush1.msra.mxu0 %v183
    %185 = vmatprep.subr.mxu0 0.0
    %v186 = vand.u32 %v135, 4294901760
    %187 = vmatpush1.msra.mxu0 %v186
    %188 = vmatprep.subr.mxu0 0.0
    %v189 = vand.u32 %v136, 4294901760
    %190 = vmatpush1.msra.mxu0 %v189
    %191 = vmatprep.subr.mxu0 0.0
    %v192 = vand.u32 %v137, 4294901760
    %193 = vmatpush1.msra.mxu0 %v192
    %194 = vmatprep.subr.mxu0 0.0
    %v195 = vand.u32 %v138, 4294901760
    %196 = vmatpush1.msra.mxu0 %v195
    %197 = vmatprep.subr.mxu0 0.0
    %v198 = vand.u32 %v139, 4294901760
    %199 = vmatpush1.msra.mxu0 %v198
    %200 = vmatprep.subr.mxu0 0.0
    %v201 = vand.u32 %v140, 4294901760
    %202 = vmatpush1.msra.mxu0 %v201
    %203 = vmatprep.subr.mxu0 0.0
    %v204 = vand.u32 %v141, 4294901760
    %205 = vmatpush1.msra.mxu0 %v204
    %206 = vmatprep.subr.mxu0 0.0
    %v207 = vand.u32 %v142, 4294901760
    %208 = vmatpush1.msra.mxu0 %v207
    %209 = vmatprep.subr.mxu0 0.0
    %v210 = vand.u32 %v143, 4294901760
    %211 = vmatpush1.msra.mxu0 %v210
    %212 = vmatprep.subr.mxu0 0.0
    %v213 = vand.u32 %v144, 4294901760
    %214 = vmatpush1.msra.mxu0 %v213
    %215 = vmatprep.subr.mxu0 0.0
    %v216 = vand.u32 %v145, 4294901760
    %217 = vmatpush1.msra.mxu0 %v216
    %218 = vmatprep.subr.mxu0 0.0
    %v219 = vand.u32 %v146, 4294901760
    %220 = vmatpush1.msra.mxu0 %v219
    %221 = vmatprep.subr.mxu0 0.0
    %v222 = vand.u32 %v147, 4294901760
    %223 = vmatpush1.msra.mxu0 %v222
    %224 = vmatprep.subr.mxu0 0.0
    %v225 = vand.u32 %v148, 4294901760
    %226 = vmatpush1.msra.mxu0 %v225
    %227 = vmatprep.subr.mxu0 0.0
    %v228 = vand.u32 %v149, 4294901760
    %229 = vmatpush1.msra.mxu0 %v228
    %230 = vmatprep.subr.mxu0 0.0
    %v231 = vand.u32 %v150, 4294901760
    %232 = vmatpush1.msra.mxu0 %v231
    %233 = vmatprep.subr.mxu0 0.0
    %v234 = vand.u32 %v151, 4294901760
    %235 = vmatpush1.msra.mxu0 %v234
    %236 = vmatprep.subr.mxu0 0.0
    %v237 = vand.u32 %v152, 4294901760
    %238 = vmatpush1.msra.mxu0 %v237
    %239 = vmatprep.subr.mxu0 0.0
    %v240 = vand.u32 %v153, 4294901760
    %241 = vmatpush1.msra.mxu0 %v240
    %242 = vmatprep.subr.mxu0 0.0
    %v243 = vand.u32 %v154, 4294901760
    %244 = vmatpush1.msra.mxu0 %v243
    %245 = vmatprep.subr.mxu0 0.0
    %v246 = vand.u32 %v155, 4294901760
    %247 = vmatpush1.msra.mxu0 %v246
    %248 = vmatprep.subr.mxu0 0.0
    %v249 = vand.u32 %v156, 4294901760
    %250 = vmatpush1.msra.mxu0 %v249
    %251 = vmatprep.subr.mxu0 0.0
    %v252 = vand.u32 %v157, 4294901760
    %253 = vmatpush1.msra.mxu0 %v252
    %v254 = vand.u32 %v125, 4294901760
    %v255 = vsub.f32 %v125, %v254
    %v256 = vand.u32 %v255, 4294901760
    %v257 = vsub.f32 %v255, %v256
    %v258 = vand.u32 %v257, 4294901760
    %259 = vmatprep.mubr.f32.mxu0 %v258
    %v260 = vand.u32 %v124, 4294901760
    %v261 = vsub.f32 %v124, %v260
    %v262 = vand.u32 %v261, 4294901760
    %v263 = vsub.f32 %v261, %v262
    %v264 = vand.u32 %v263, 4294901760
    %265 = vmatmul.mubr.f32.gmra.mrb[0].mxu0 %v264
    %v266 = vpop.f32.mrb[0].mxu0
    %v267 = vadd.f32 0.0, %v266
    %v268 = vpop.f32.mrb[0].mxu0
    %269 = vdwg.mxu0
    %270 = vmatprep.subr.mxu0 0.0
    %v271 = vand.u32 %v126, 4294901760
    %v272 = vsub.f32 %v126, %v271
    %v273 = vand.u32 %v272, 4294901760
    %v274 = vsub.f32 %v272, %v273
    %v275 = vand.u32 %v274, 4294901760
    %276 = vmatpush1.msra.mxu0 %v275
    %277 = vmatprep.subr.mxu0 0.0
    %v278 = vand.u32 %v127, 4294901760
    %v279 = vsub.f32 %v127, %v278
    %v280 = vand.u32 %v279, 4294901760
    %v281 = vsub.f32 %v279, %v280
    %v282 = vand.u32 %v281, 4294901760
    %283 = vmatpush1.msra.mxu0 %v282
    %284 = vmatprep.subr.mxu0 0.0
    %v285 = vand.u32 %v128, 4294901760
    %v286 = vsub.f32 %v128, %v285
    %v287 = vand.u32 %v286, 4294901760
    %v288 = vsub.f32 %v286, %v287
    %v289 = vand.u32 %v288, 4294901760
    %290 = vmatpush1.msra.mxu0 %v289
    %291 = vmatprep.subr.mxu0 0.0
    %v292 = vand.u32 %v129, 4294901760
    %v293 = vsub.f32 %v129, %v292
    %v294 = vand.u32 %v293, 4294901760
    %v295 = vsub.f32 %v293, %v294
    %v296 = vand.u32 %v295, 4294901760
    %297 = vmatpush1.msra.mxu0 %v296
    %298 = vmatprep.subr.mxu0 0.0
    %v299 = vand.u32 %v130, 4294901760
    %v300 = vsub.f32 %v130, %v299
    %v301 = vand.u32 %v300, 4294901760
    %v302 = vsub.f32 %v300, %v301
    %v303 = vand.u32 %v302, 4294901760
    %304 = vmatpush1.msra.mxu0 %v303
    %305 = vmatprep.subr.mxu0 0.0
    %v306 = vand.u32 %v131, 4294901760
    %v307 = vsub.f32 %v131, %v306
    %v308 = vand.u32 %v307, 4294901760
    %v309 = vsub.f32 %v307, %v308
    %v310 = vand.u32 %v309, 4294901760
    %311 = vmatpush1.msra.mxu0 %v310
    %312 = vmatprep.subr.mxu0 0.0
    %v313 = vand.u32 %v132, 4294901760
    %v314 = vsub.f32 %v132, %v313
    %v315 = vand.u32 %v314, 4294901760
    %v316 = vsub.f32 %v314, %v315
    %v317 = vand.u32 %v316, 4294901760
    %318 = vmatpush1.msra.mxu0 %v317
    %319 = vmatprep.subr.mxu0 0.0
    %v320 = vand.u32 %v133, 4294901760
    %v321 = vsub.f32 %v133, %v320
    %v322 = vand.u32 %v321, 4294901760
    %v323 = vsub.f32 %v321, %v322
    %v324 = vand.u32 %v323, 4294901760
    %325 = vmatpush1.msra.mxu0 %v324
    %326 = vmatprep.subr.mxu0 0.0
    %v327 = vand.u32 %v134, 4294901760
    %v328 = vsub.f32 %v134, %v327
    %v329 = vand.u32 %v328, 4294901760
    %v330 = vsub.f32 %v328, %v329
    %v331 = vand.u32 %v330, 4294901760
    %332 = vmatpush1.msra.mxu0 %v331
    %333 = vmatprep.subr.mxu0 0.0
    %v334 = vand.u32 %v135, 4294901760
    %v335 = vsub.f32 %v135, %v334
    %v336 = vand.u32 %v335, 4294901760
    %v337 = vsub.f32 %v335, %v336
    %v338 = vand.u32 %v337, 4294901760
    %339 = vmatpush1.msra.mxu0 %v338
    %340 = vmatprep.subr.mxu0 0.0
    %v341 = vand.u32 %v136, 4294901760
    %v342 = vsub.f32 %v136, %v341
    %v343 = vand.u32 %v342, 4294901760
    %v344 = vsub.f32 %v342, %v343
    %v345 = vand.u32 %v344, 4294901760
    %346 = vmatpush1.msra.mxu0 %v345
    %347 = vmatprep.subr.mxu0 0.0
    %v348 = vand.u32 %v137, 4294901760
    %v349 = vsub.f32 %v137, %v348
    %v350 = vand.u32 %v349, 4294901760
    %v351 = vsub.f32 %v349, %v350
    %v352 = vand.u32 %v351, 4294901760
    %353 = vmatpush1.msra.mxu0 %v352
    %354 = vmatprep.subr.mxu0 0.0
    %v355 = vand.u32 %v138, 4294901760
    %v356 = vsub.f32 %v138, %v355
    %v357 = vand.u32 %v356, 4294901760
    %v358 = vsub.f32 %v356, %v357
    %v359 = vand.u32 %v358, 4294901760
    %360 = vmatpush1.msra.mxu0 %v359
    %361 = vmatprep.subr.mxu0 0.0
    %v362 = vand.u32 %v139, 4294901760
    %v363 = vsub.f32 %v139, %v362
    %v364 = vand.u32 %v363, 4294901760
    %v365 = vsub.f32 %v363, %v364
    %v366 = vand.u32 %v365, 4294901760
    %367 = vmatpush1.msra.mxu0 %v366
    %368 = vmatprep.subr.mxu0 0.0
    %v369 = vand.u32 %v140, 4294901760
    %v370 = vsub.f32 %v140, %v369
    %v371 = vand.u32 %v370, 4294901760
    %v372 = vsub.f32 %v370, %v371
    %v373 = vand.u32 %v372, 4294901760
    %374 = vmatpush1.msra.mxu0 %v373
    %375 = vmatprep.subr.mxu0 0.0
    %v376 = vand.u32 %v141, 4294901760
    %v377 = vsub.f32 %v141, %v376
    %v378 = vand.u32 %v377, 4294901760
    %v379 = vsub.f32 %v377, %v378
    %v380 = vand.u32 %v379, 4294901760
    %381 = vmatpush1.msra.mxu0 %v380
    %382 = vmatprep.subr.mxu0 0.0
    %v383 = vand.u32 %v142, 4294901760
    %v384 = vsub.f32 %v142, %v383
    %v385 = vand.u32 %v384, 4294901760
    %v386 = vsub.f32 %v384, %v385
    %v387 = vand.u32 %v386, 4294901760
    %388 = vmatpush1.msra.mxu0 %v387
    %389 = vmatprep.subr.mxu0 0.0
    %v390 = vand.u32 %v143, 4294901760
    %v391 = vsub.f32 %v143, %v390
    %v392 = vand.u32 %v391, 4294901760
    %v393 = vsub.f32 %v391, %v392
    %v394 = vand.u32 %v393, 4294901760
    %395 = vmatpush1.msra.mxu0 %v394
    %396 = vmatprep.subr.mxu0 0.0
    %v397 = vand.u32 %v144, 4294901760
    %v398 = vsub.f32 %v144, %v397
    %v399 = vand.u32 %v398, 4294901760
    %v400 = vsub.f32 %v398, %v399
    %v401 = vand.u32 %v400, 4294901760
    %402 = vmatpush1.msra.mxu0 %v401
    %403 = vmatprep.subr.mxu0 0.0
    %v404 = vand.u32 %v145, 4294901760
    %v405 = vsub.f32 %v145, %v404
    %v406 = vand.u32 %v405, 4294901760
    %v407 = vsub.f32 %v405, %v406
    %v408 = vand.u32 %v407, 4294901760
    %409 = vmatpush1.msra.mxu0 %v408
    %410 = vmatprep.subr.mxu0 0.0
    %v411 = vand.u32 %v146, 4294901760
    %v412 = vsub.f32 %v146, %v411
    %v413 = vand.u32 %v412, 4294901760
    %v414 = vsub.f32 %v412, %v413
    %v415 = vand.u32 %v414, 4294901760
    %416 = vmatpush1.msra.mxu0 %v415
    %417 = vmatprep.subr.mxu0 0.0
    %v418 = vand.u32 %v147, 4294901760
    %v419 = vsub.f32 %v147, %v418
    %v420 = vand.u32 %v419, 4294901760
    %v421 = vsub.f32 %v419, %v420
    %v422 = vand.u32 %v421, 4294901760
    %423 = vmatpush1.msra.mxu0 %v422
    %424 = vmatprep.subr.mxu0 0.0
    %v425 = vand.u32 %v148, 4294901760
    %v426 = vsub.f32 %v148, %v425
    %v427 = vand.u32 %v426, 4294901760
    %v428 = vsub.f32 %v426, %v427
    %v429 = vand.u32 %v428, 4294901760
    %430 = vmatpush1.msra.mxu0 %v429
    %431 = vmatprep.subr.mxu0 0.0
    %v432 = vand.u32 %v149, 4294901760
    %v433 = vsub.f32 %v149, %v432
    %v434 = vand.u32 %v433, 4294901760
    %v435 = vsub.f32 %v433, %v434
    %v436 = vand.u32 %v435, 4294901760
    %437 = vmatpush1.msra.mxu0 %v436
    %438 = vmatprep.subr.mxu0 0.0
    %v439 = vand.u32 %v150, 4294901760
    %v440 = vsub.f32 %v150, %v439
    %v441 = vand.u32 %v440, 4294901760
    %v442 = vsub.f32 %v440, %v441
    %v443 = vand.u32 %v442, 4294901760
    %444 = vmatpush1.msra.mxu0 %v443
    %445 = vmatprep.subr.mxu0 0.0
    %v446 = vand.u32 %v151, 4294901760
    %v447 = vsub.f32 %v151, %v446
    %v448 = vand.u32 %v447, 4294901760
    %v449 = vsub.f32 %v447, %v448
    %v450 = vand.u32 %v449, 4294901760
    %451 = vmatpush1.msra.mxu0 %v450
    %452 = vmatprep.subr.mxu0 0.0
    %v453 = vand.u32 %v152, 4294901760
    %v454 = vsub.f32 %v152, %v453
    %v455 = vand.u32 %v454, 4294901760
    %v456 = vsub.f32 %v454, %v455
    %v457 = vand.u32 %v456, 4294901760
    %458 = vmatpush1.msra.mxu0 %v457
    %459 = vmatprep.subr.mxu0 0.0
    %v460 = vand.u32 %v153, 4294901760
    %v461 = vsub.f32 %v153, %v460
    %v462 = vand.u32 %v461, 4294901760
    %v463 = vsub.f32 %v461, %v462
    %v464 = vand.u32 %v463, 4294901760
    %465 = vmatpush1.msra.mxu0 %v464
    %466 = vmatprep.subr.mxu0 0.0
    %v467 = vand.u32 %v154, 4294901760
    %v468 = vsub.f32 %v154, %v467
    %v469 = vand.u32 %v468, 4294901760
    %v470 = vsub.f32 %v468, %v469
    %v471 = vand.u32 %v470, 4294901760
    %472 = vmatpush1.msra.mxu0 %v471
    %473 = vmatprep.subr.mxu0 0.0
    %v474 = vand.u32 %v155, 4294901760
    %v475 = vsub.f32 %v155, %v474
    %v476 = vand.u32 %v475, 4294901760
    %v477 = vsub.f32 %v475, %v476
    %v478 = vand.u32 %v477, 4294901760
    %479 = vmatpush1.msra.mxu0 %v478
    %480 = vmatprep.subr.mxu0 0.0
    %v481 = vand.u32 %v156, 4294901760
    %v482 = vsub.f32 %v156, %v481
    %v483 = vand.u32 %v482, 4294901760
    %v484 = vsub.f32 %v482, %v483
    %v485 = vand.u32 %v484, 4294901760
    %486 = vmatpush1.msra.mxu0 %v485
    %487 = vmatprep.subr.mxu0 0.0
    %v488 = vand.u32 %v157, 4294901760
    %v489 = vsub.f32 %v157, %v488
    %v490 = vand.u32 %v489, 4294901760
    %v491 = vsub.f32 %v489, %v490
    %v492 = vand.u32 %v491, 4294901760
    %493 = vmatpush1.msra.mxu0 %v492
    %v494 = vand.u32 %v125, 4294901760
    %495 = vmatprep.mubr.f32.mxu0 %v494
    %v496 = vand.u32 %v124, 4294901760
    %497 = vmatmul.mubr.f32.gmra.mrb[0].mxu0 %v496
    %v498 = vpop.f32.mrb[0].mxu0
    %v499 = vadd.f32 %v267, %v498
    %v500 = vpop.f32.mrb[0].mxu0
    %501 = vdwg.mxu0
    %502 = vmatprep.subr.mxu0 0.0
    %v503 = vand.u32 %v126, 4294901760
    %v504 = vsub.f32 %v126, %v503
    %505 = vmatpush1.msra.mxu0 %v504
    %506 = vmatprep.subr.mxu0 0.0
    %v507 = vand.u32 %v127, 4294901760
    %v508 = vsub.f32 %v127, %v507
    %509 = vmatpush1.msra.mxu0 %v508
    %510 = vmatprep.subr.mxu0 0.0
    %v511 = vand.u32 %v128, 4294901760
    %v512 = vsub.f32 %v128, %v511
    %513 = vmatpush1.msra.mxu0 %v512
    %514 = vmatprep.subr.mxu0 0.0
    %v515 = vand.u32 %v129, 4294901760
    %v516 = vsub.f32 %v129, %v515
    %517 = vmatpush1.msra.mxu0 %v516
    %518 = vmatprep.subr.mxu0 0.0
    %v519 = vand.u32 %v130, 4294901760
    %v520 = vsub.f32 %v130, %v519
    %521 = vmatpush1.msra.mxu0 %v520
    %522 = vmatprep.subr.mxu0 0.0
    %v523 = vand.u32 %v131, 4294901760
    %v524 = vsub.f32 %v131, %v523
    %525 = vmatpush1.msra.mxu0 %v524
    %526 = vmatprep.subr.mxu0 0.0
    %v527 = vand.u32 %v132, 4294901760
    %v528 = vsub.f32 %v132, %v527
    %529 = vmatpush1.msra.mxu0 %v528
    %530 = vmatprep.subr.mxu0 0.0
    %v531 = vand.u32 %v133, 4294901760
    %v532 = vsub.f32 %v133, %v531
    %533 = vmatpush1.msra.mxu0 %v532
    %534 = vmatprep.subr.mxu0 0.0
    %v535 = vand.u32 %v134, 4294901760
    %v536 = vsub.f32 %v134, %v535
    %537 = vmatpush1.msra.mxu0 %v536
    %538 = vmatprep.subr.mxu0 0.0
    %v539 = vand.u32 %v135, 4294901760
    %v540 = vsub.f32 %v135, %v539
    %541 = vmatpush1.msra.mxu0 %v540
    %542 = vmatprep.subr.mxu0 0.0
    %v543 = vand.u32 %v136, 4294901760
    %v544 = vsub.f32 %v136, %v543
    %545 = vmatpush1.msra.mxu0 %v544
    %546 = vmatprep.subr.mxu0 0.0
    %v547 = vand.u32 %v137, 4294901760
    %v548 = vsub.f32 %v137, %v547
    %549 = vmatpush1.msra.mxu0 %v548
    %550 = vmatprep.subr.mxu0 0.0
    %v551 = vand.u32 %v138, 4294901760
    %v552 = vsub.f32 %v138, %v551
    %553 = vmatpush1.msra.mxu0 %v552
    %554 = vmatprep.subr.mxu0 0.0
    %v555 = vand.u32 %v139, 4294901760
    %v556 = vsub.f32 %v139, %v555
    %557 = vmatpush1.msra.mxu0 %v556
    %558 = vmatprep.subr.mxu0 0.0
    %v559 = vand.u32 %v140, 4294901760
    %v560 = vsub.f32 %v140, %v559
    %561 = vmatpush1.msra.mxu0 %v560
    %562 = vmatprep.subr.mxu0 0.0
    %v563 = vand.u32 %v141, 4294901760
    %v564 = vsub.f32 %v141, %v563
    %565 = vmatpush1.msra.mxu0 %v564
    %566 = vmatprep.subr.mxu0 0.0
    %v567 = vand.u32 %v142, 4294901760
    %v568 = vsub.f32 %v142, %v567
    %569 = vmatpush1.msra.mxu0 %v568
    %570 = vmatprep.subr.mxu0 0.0
    %v571 = vand.u32 %v143, 4294901760
    %v572 = vsub.f32 %v143, %v571
    %573 = vmatpush1.msra.mxu0 %v572
    %574 = vmatprep.subr.mxu0 0.0
    %v575 = vand.u32 %v144, 4294901760
    %v576 = vsub.f32 %v144, %v575
    %577 = vmatpush1.msra.mxu0 %v576
    %578 = vmatprep.subr.mxu0 0.0
    %v579 = vand.u32 %v145, 4294901760
    %v580 = vsub.f32 %v145, %v579
    %581 = vmatpush1.msra.mxu0 %v580
    %582 = vmatprep.subr.mxu0 0.0
    %v583 = vand.u32 %v146, 4294901760
    %v584 = vsub.f32 %v146, %v583
    %585 = vmatpush1.msra.mxu0 %v584
    %586 = vmatprep.subr.mxu0 0.0
    %v587 = vand.u32 %v147, 4294901760
    %v588 = vsub.f32 %v147, %v587
    %589 = vmatpush1.msra.mxu0 %v588
    %590 = vmatprep.subr.mxu0 0.0
    %v591 = vand.u32 %v148, 4294901760
    %v592 = vsub.f32 %v148, %v591
    %593 = vmatpush1.msra.mxu0 %v592
    %594 = vmatprep.subr.mxu0 0.0
    %v595 = vand.u32 %v149, 4294901760
    %v596 = vsub.f32 %v149, %v595
    %597 = vmatpush1.msra.mxu0 %v596
    %598 = vmatprep.subr.mxu0 0.0
    %v599 = vand.u32 %v150, 4294901760
    %v600 = vsub.f32 %v150, %v599
    %601 = vmatpush1.msra.mxu0 %v600
    %602 = vmatprep.subr.mxu0 0.0
    %v603 = vand.u32 %v151, 4294901760
    %v604 = vsub.f32 %v151, %v603
    %605 = vmatpush1.msra.mxu0 %v604
    %606 = vmatprep.subr.mxu0 0.0
    %v607 = vand.u32 %v152, 4294901760
    %v608 = vsub.f32 %v152, %v607
    %609 = vmatpush1.msra.mxu0 %v608
    %610 = vmatprep.subr.mxu0 0.0
    %v611 = vand.u32 %v153, 4294901760
    %v612 = vsub.f32 %v153, %v611
    %613 = vmatpush1.msra.mxu0 %v612
    %614 = vmatprep.subr.mxu0 0.0
    %v615 = vand.u32 %v154, 4294901760
    %v616 = vsub.f32 %v154, %v615
    %617 = vmatpush1.msra.mxu0 %v616
    %618 = vmatprep.subr.mxu0 0.0
    %v619 = vand.u32 %v155, 4294901760
    %v620 = vsub.f32 %v155, %v619
    %621 = vmatpush1.msra.mxu0 %v620
    %622 = vmatprep.subr.mxu0 0.0
    %v623 = vand.u32 %v156, 4294901760
    %v624 = vsub.f32 %v156, %v623
    %625 = vmatpush1.msra.mxu0 %v624
    %626 = vmatprep.subr.mxu0 0.0
    %v627 = vand.u32 %v157, 4294901760
    %v628 = vsub.f32 %v157, %v627
    %629 = vmatpush1.msra.mxu0 %v628
    %v630 = vand.u32 %v125, 4294901760
    %v631 = vsub.f32 %v125, %v630
    %632 = vmatprep.mubr.f32.mxu0 %v631
    %v633 = vand.u32 %v124, 4294901760
    %v634 = vsub.f32 %v124, %v633
    %635 = vmatmul.mubr.f32.gmra.mrb[0].mxu0 %v634
    %v636 = vpop.f32.mrb[0].mxu0
    %v637 = vadd.f32 %v499, %v636
    %v638 = vpop.f32.mrb[0].mxu0
    %639 = vdwg.mxu0
    %640 = vmatprep.subr.mxu0 0.0
    %v641 = vand.u32 %v126, 4294901760
    %642 = vmatpush1.msra.mxu0 %v641
    %643 = vmatprep.subr.mxu0 0.0
    %v644 = vand.u32 %v127, 4294901760
    %645 = vmatpush1.msra.mxu0 %v644
    %646 = vmatprep.subr.mxu0 0.0
    %v647 = vand.u32 %v128, 4294901760
    %648 = vmatpush1.msra.mxu0 %v647
    %649 = vmatprep.subr.mxu0 0.0
    %v650 = vand.u32 %v129, 4294901760
    %651 = vmatpush1.msra.mxu0 %v650
    %652 = vmatprep.subr.mxu0 0.0
    %v653 = vand.u32 %v130, 4294901760
    %654 = vmatpush1.msra.mxu0 %v653
    %655 = vmatprep.subr.mxu0 0.0
    %v656 = vand.u32 %v131, 4294901760
    %657 = vmatpush1.msra.mxu0 %v656
    %658 = vmatprep.subr.mxu0 0.0
    %v659 = vand.u32 %v132, 4294901760
    %660 = vmatpush1.msra.mxu0 %v659
    %661 = vmatprep.subr.mxu0 0.0
    %v662 = vand.u32 %v133, 4294901760
    %663 = vmatpush1.msra.mxu0 %v662
    %664 = vmatprep.subr.mxu0 0.0
    %v665 = vand.u32 %v134, 4294901760
    %666 = vmatpush1.msra.mxu0 %v665
    %667 = vmatprep.subr.mxu0 0.0
    %v668 = vand.u32 %v135, 4294901760
    %669 = vmatpush1.msra.mxu0 %v668
    %670 = vmatprep.subr.mxu0 0.0
    %v671 = vand.u32 %v136, 4294901760
    %672 = vmatpush1.msra.mxu0 %v671
    %673 = vmatprep.subr.mxu0 0.0
    %v674 = vand.u32 %v137, 4294901760
    %675 = vmatpush1.msra.mxu0 %v674
    %676 = vmatprep.subr.mxu0 0.0
    %v677 = vand.u32 %v138, 4294901760
    %678 = vmatpush1.msra.mxu0 %v677
    %679 = vmatprep.subr.mxu0 0.0
    %v680 = vand.u32 %v139, 4294901760
    %681 = vmatpush1.msra.mxu0 %v680
    %682 = vmatprep.subr.mxu0 0.0
    %v683 = vand.u32 %v140, 4294901760
    %684 = vmatpush1.msra.mxu0 %v683
    %685 = vmatprep.subr.mxu0 0.0
    %v686 = vand.u32 %v141, 4294901760
    %687 = vmatpush1.msra.mxu0 %v686
    %688 = vmatprep.subr.mxu0 0.0
    %v689 = vand.u32 %v142, 4294901760
    %690 = vmatpush1.msra.mxu0 %v689
    %691 = vmatprep.subr.mxu0 0.0
    %v692 = vand.u32 %v143, 4294901760
    %693 = vmatpush1.msra.mxu0 %v692
    %694 = vmatprep.subr.mxu0 0.0
    %v695 = vand.u32 %v144, 4294901760
    %696 = vmatpush1.msra.mxu0 %v695
    %697 = vmatprep.subr.mxu0 0.0
    %v698 = vand.u32 %v145, 4294901760
    %699 = vmatpush1.msra.mxu0 %v698
    %700 = vmatprep.subr.mxu0 0.0
    %v701 = vand.u32 %v146, 4294901760
    %702 = vmatpush1.msra.mxu0 %v701
    %703 = vmatprep.subr.mxu0 0.0
    %v704 = vand.u32 %v147, 4294901760
    %705 = vmatpush1.msra.mxu0 %v704
    %706 = vmatprep.subr.mxu0 0.0
    %v707 = vand.u32 %v148, 4294901760
    %708 = vmatpush1.msra.mxu0 %v707
    %709 = vmatprep.subr.mxu0 0.0
    %v710 = vand.u32 %v149, 4294901760
    %711 = vmatpush1.msra.mxu0 %v710
    %712 = vmatprep.subr.mxu0 0.0
    %v713 = vand.u32 %v150, 4294901760
    %714 = vmatpush1.msra.mxu0 %v713
    %715 = vmatprep.subr.mxu0 0.0
    %v716 = vand.u32 %v151, 4294901760
    %717 = vmatpush1.msra.mxu0 %v716
    %718 = vmatprep.subr.mxu0 0.0
    %v719 = vand.u32 %v152, 4294901760
    %720 = vmatpush1.msra.mxu0 %v719
    %721 = vmatprep.subr.mxu0 0.0
    %v722 = vand.u32 %v153, 4294901760
    %723 = vmatpush1.msra.mxu0 %v722
    %724 = vmatprep.subr.mxu0 0.0
    %v725 = vand.u32 %v154, 4294901760
    %726 = vmatpush1.msra.mxu0 %v725
    %727 = vmatprep.subr.mxu0 0.0
    %v728 = vand.u32 %v155, 4294901760
    %729 = vmatpush1.msra.mxu0 %v728
    %730 = vmatprep.subr.mxu0 0.0
    %v731 = vand.u32 %v156, 4294901760
    %732 = vmatpush1.msra.mxu0 %v731
    %733 = vmatprep.subr.mxu0 0.0
    %v734 = vand.u32 %v157, 4294901760
    %735 = vmatpush1.msra.mxu0 %v734
    %v736 = vand.u32 %v125, 4294901760
    %v737 = vsub.f32 %v125, %v736
    %v738 = vand.u32 %v737, 4294901760
    %739 = vmatprep.mubr.f32.mxu0 %v738
    %v740 = vand.u32 %v124, 4294901760
    %v741 = vsub.f32 %v124, %v740
    %v742 = vand.u32 %v741, 4294901760
    %743 = vmatmul.mubr.f32.gmra.mrb[0].mxu0 %v742
    %v744 = vpop.f32.mrb[0].mxu0
    %v745 = vadd.f32 %v637, %v744
    %v746 = vpop.f32.mrb[0].mxu0
    %747 = vdwg.mxu0
    %748 = vmatprep.subr.mxu0 0.0
    %v749 = vand.u32 %v126, 4294901760
    %v750 = vsub.f32 %v126, %v749
    %v751 = vand.u32 %v750, 4294901760
    %752 = vmatpush1.msra.mxu0 %v751
    %753 = vmatprep.subr.mxu0 0.0
    %v754 = vand.u32 %v127, 4294901760
    %v755 = vsub.f32 %v127, %v754
    %v756 = vand.u32 %v755, 4294901760
    %757 = vmatpush1.msra.mxu0 %v756
    %758 = vmatprep.subr.mxu0 0.0
    %v759 = vand.u32 %v128, 4294901760
    %v760 = vsub.f32 %v128, %v759
    %v761 = vand.u32 %v760, 4294901760
    %762 = vmatpush1.msra.mxu0 %v761
    %763 = vmatprep.subr.mxu0 0.0
    %v764 = vand.u32 %v129, 4294901760
    %v765 = vsub.f32 %v129, %v764
    %v766 = vand.u32 %v765, 4294901760
    %767 = vmatpush1.msra.mxu0 %v766
    %768 = vmatprep.subr.mxu0 0.0
    %v769 = vand.u32 %v130, 4294901760
    %v770 = vsub.f32 %v130, %v769
    %v771 = vand.u32 %v770, 4294901760
    %772 = vmatpush1.msra.mxu0 %v771
    %773 = vmatprep.subr.mxu0 0.0
    %v774 = vand.u32 %v131, 4294901760
    %v775 = vsub.f32 %v131, %v774
    %v776 = vand.u32 %v775, 4294901760
    %777 = vmatpush1.msra.mxu0 %v776
    %778 = vmatprep.subr.mxu0 0.0
    %v779 = vand.u32 %v132, 4294901760
    %v780 = vsub.f32 %v132, %v779
    %v781 = vand.u32 %v780, 4294901760
    %782 = vmatpush1.msra.mxu0 %v781
    %783 = vmatprep.subr.mxu0 0.0
    %v784 = vand.u32 %v133, 4294901760
    %v785 = vsub.f32 %v133, %v784
    %v786 = vand.u32 %v785, 4294901760
    %787 = vmatpush1.msra.mxu0 %v786
    %788 = vmatprep.subr.mxu0 0.0
    %v789 = vand.u32 %v134, 4294901760
    %v790 = vsub.f32 %v134, %v789
    %v791 = vand.u32 %v790, 4294901760
    %792 = vmatpush1.msra.mxu0 %v791
    %793 = vmatprep.subr.mxu0 0.0
    %v794 = vand.u32 %v135, 4294901760
    %v795 = vsub.f32 %v135, %v794
    %v796 = vand.u32 %v795, 4294901760
    %797 = vmatpush1.msra.mxu0 %v796
    %798 = vmatprep.subr.mxu0 0.0
    %v799 = vand.u32 %v136, 4294901760
    %v800 = vsub.f32 %v136, %v799
    %v801 = vand.u32 %v800, 4294901760
    %802 = vmatpush1.msra.mxu0 %v801
    %803 = vmatprep.subr.mxu0 0.0
    %v804 = vand.u32 %v137, 4294901760
    %v805 = vsub.f32 %v137, %v804
    %v806 = vand.u32 %v805, 4294901760
    %807 = vmatpush1.msra.mxu0 %v806
    %808 = vmatprep.subr.mxu0 0.0
    %v809 = vand.u32 %v138, 4294901760
    %v810 = vsub.f32 %v138, %v809
    %v811 = vand.u32 %v810, 4294901760
    %812 = vmatpush1.msra.mxu0 %v811
    %813 = vmatprep.subr.mxu0 0.0
    %v814 = vand.u32 %v139, 4294901760
    %v815 = vsub.f32 %v139, %v814
    %v816 = vand.u32 %v815, 4294901760
    %817 = vmatpush1.msra.mxu0 %v816
    %818 = vmatprep.subr.mxu0 0.0
    %v819 = vand.u32 %v140, 4294901760
    %v820 = vsub.f32 %v140, %v819
    %v821 = vand.u32 %v820, 4294901760
    %822 = vmatpush1.msra.mxu0 %v821
    %823 = vmatprep.subr.mxu0 0.0
    %v824 = vand.u32 %v141, 4294901760
    %v825 = vsub.f32 %v141, %v824
    %v826 = vand.u32 %v825, 4294901760
    %827 = vmatpush1.msra.mxu0 %v826
    %828 = vmatprep.subr.mxu0 0.0
    %v829 = vand.u32 %v142, 4294901760
    %v830 = vsub.f32 %v142, %v829
    %v831 = vand.u32 %v830, 4294901760
    %832 = vmatpush1.msra.mxu0 %v831
    %833 = vmatprep.subr.mxu0 0.0
    %v834 = vand.u32 %v143, 4294901760
    %v835 = vsub.f32 %v143, %v834
    %v836 = vand.u32 %v835, 4294901760
    %837 = vmatpush1.msra.mxu0 %v836
    %838 = vmatprep.subr.mxu0 0.0
    %v839 = vand.u32 %v144, 4294901760
    %v840 = vsub.f32 %v144, %v839
    %v841 = vand.u32 %v840, 4294901760
    %842 = vmatpush1.msra.mxu0 %v841
    %843 = vmatprep.subr.mxu0 0.0
    %v844 = vand.u32 %v145, 4294901760
    %v845 = vsub.f32 %v145, %v844
    %v846 = vand.u32 %v845, 4294901760
    %847 = vmatpush1.msra.mxu0 %v846
    %848 = vmatprep.subr.mxu0 0.0
    %v849 = vand.u32 %v146, 4294901760
    %v850 = vsub.f32 %v146, %v849
    %v851 = vand.u32 %v850, 4294901760
    %852 = vmatpush1.msra.mxu0 %v851
    %853 = vmatprep.subr.mxu0 0.0
    %v854 = vand.u32 %v147, 4294901760
    %v855 = vsub.f32 %v147, %v854
    %v856 = vand.u32 %v855, 4294901760
    %857 = vmatpush1.msra.mxu0 %v856
    %858 = vmatprep.subr.mxu0 0.0
    %v859 = vand.u32 %v148, 4294901760
    %v860 = vsub.f32 %v148, %v859
    %v861 = vand.u32 %v860, 4294901760
    %862 = vmatpush1.msra.mxu0 %v861
    %863 = vmatprep.subr.mxu0 0.0
    %v864 = vand.u32 %v149, 4294901760
    %v865 = vsub.f32 %v149, %v864
    %v866 = vand.u32 %v865, 4294901760
    %867 = vmatpush1.msra.mxu0 %v866
    %868 = vmatprep.subr.mxu0 0.0
    %v869 = vand.u32 %v150, 4294901760
    %v870 = vsub.f32 %v150, %v869
    %v871 = vand.u32 %v870, 4294901760
    %872 = vmatpush1.msra.mxu0 %v871
    %873 = vmatprep.subr.mxu0 0.0
    %v874 = vand.u32 %v151, 4294901760
    %v875 = vsub.f32 %v151, %v874
    %v876 = vand.u32 %v875, 4294901760
    %877 = vmatpush1.msra.mxu0 %v876
    %878 = vmatprep.subr.mxu0 0.0
    %v879 = vand.u32 %v152, 4294901760
    %v880 = vsub.f32 %v152, %v879
    %v881 = vand.u32 %v880, 4294901760
    %882 = vmatpush1.msra.mxu0 %v881
    %883 = vmatprep.subr.mxu0 0.0
    %v884 = vand.u32 %v153, 4294901760
    %v885 = vsub.f32 %v153, %v884
    %v886 = vand.u32 %v885, 4294901760
    %887 = vmatpush1.msra.mxu0 %v886
    %888 = vmatprep.subr.mxu0 0.0
    %v889 = vand.u32 %v154, 4294901760
    %v890 = vsub.f32 %v154, %v889
    %v891 = vand.u32 %v890, 4294901760
    %892 = vmatpush1.msra.mxu0 %v891
    %893 = vmatprep.subr.mxu0 0.0
    %v894 = vand.u32 %v155, 4294901760
    %v895 = vsub.f32 %v155, %v894
    %v896 = vand.u32 %v895, 4294901760
    %897 = vmatpush1.msra.mxu0 %v896
    %898 = vmatprep.subr.mxu0 0.0
    %v899 = vand.u32 %v156, 4294901760
    %v900 = vsub.f32 %v156, %v899
    %v901 = vand.u32 %v900, 4294901760
    %902 = vmatpush1.msra.mxu0 %v901
    %903 = vmatprep.subr.mxu0 0.0
    %v904 = vand.u32 %v157, 4294901760
    %v905 = vsub.f32 %v157, %v904
    %v906 = vand.u32 %v905, 4294901760
    %907 = vmatpush1.msra.mxu0 %v906
    %v908 = vand.u32 %v125, 4294901760
    %909 = vmatprep.mubr.f32.mxu0 %v908
    %v910 = vand.u32 %v124, 4294901760
    %911 = vmatmul.mubr.f32.gmra.mrb[0].mxu0 %v910
    %v912 = vpop.f32.mrb[0].mxu0
    %v913 = vadd.f32 %v745, %v912
    %v914 = vpop.f32.mrb[0].mxu0
    %915 = vdwg.mxu0
    %916 = vmatprep.subr.mxu0 0.0
    %v917 = vand.u32 %v126, 4294901760
    %918 = vmatpush1.msra.mxu0 %v917
    %919 = vmatprep.subr.mxu0 0.0
    %v920 = vand.u32 %v127, 4294901760
    %921 = vmatpush1.msra.mxu0 %v920
    %922 = vmatprep.subr.mxu0 0.0
    %v923 = vand.u32 %v128, 4294901760
    %924 = vmatpush1.msra.mxu0 %v923
    %925 = vmatprep.subr.mxu0 0.0
    %v926 = vand.u32 %v129, 4294901760
    %927 = vmatpush1.msra.mxu0 %v926
    %928 = vmatprep.subr.mxu0 0.0
    %v929 = vand.u32 %v130, 4294901760
    %930 = vmatpush1.msra.mxu0 %v929
    %931 = vmatprep.subr.mxu0 0.0
    %v932 = vand.u32 %v131, 4294901760
    %933 = vmatpush1.msra.mxu0 %v932
    %934 = vmatprep.subr.mxu0 0.0
    %v935 = vand.u32 %v132, 4294901760
    %936 = vmatpush1.msra.mxu0 %v935
    %937 = vmatprep.subr.mxu0 0.0
    %v938 = vand.u32 %v133, 4294901760
    %939 = vmatpush1.msra.mxu0 %v938
    %940 = vmatprep.subr.mxu0 0.0
    %v941 = vand.u32 %v134, 4294901760
    %942 = vmatpush1.msra.mxu0 %v941
    %943 = vmatprep.subr.mxu0 0.0
    %v944 = vand.u32 %v135, 4294901760
    %945 = vmatpush1.msra.mxu0 %v944
    %946 = vmatprep.subr.mxu0 0.0
    %v947 = vand.u32 %v136, 4294901760
    %948 = vmatpush1.msra.mxu0 %v947
    %949 = vmatprep.subr.mxu0 0.0
    %v950 = vand.u32 %v137, 4294901760
    %951 = vmatpush1.msra.mxu0 %v950
    %952 = vmatprep.subr.mxu0 0.0
    %v953 = vand.u32 %v138, 4294901760
    %954 = vmatpush1.msra.mxu0 %v953
    %955 = vmatprep.subr.mxu0 0.0
    %v956 = vand.u32 %v139, 4294901760
    %957 = vmatpush1.msra.mxu0 %v956
    %958 = vmatprep.subr.mxu0 0.0
    %v959 = vand.u32 %v140, 4294901760
    %960 = vmatpush1.msra.mxu0 %v959
    %961 = vmatprep.subr.mxu0 0.0
    %v962 = vand.u32 %v141, 4294901760
    %963 = vmatpush1.msra.mxu0 %v962
    %964 = vmatprep.subr.mxu0 0.0
    %v965 = vand.u32 %v142, 4294901760
    %966 = vmatpush1.msra.mxu0 %v965
    %967 = vmatprep.subr.mxu0 0.0
    %v968 = vand.u32 %v143, 4294901760
    %969 = vmatpush1.msra.mxu0 %v968
    %970 = vmatprep.subr.mxu0 0.0
    %v971 = vand.u32 %v144, 4294901760
    %972 = vmatpush1.msra.mxu0 %v971
    %973 = vmatprep.subr.mxu0 0.0
    %v974 = vand.u32 %v145, 4294901760
    %975 = vmatpush1.msra.mxu0 %v974
    %976 = vmatprep.subr.mxu0 0.0
    %v977 = vand.u32 %v146, 4294901760
    %978 = vmatpush1.msra.mxu0 %v977
    %979 = vmatprep.subr.mxu0 0.0
    %v980 = vand.u32 %v147, 4294901760
    %981 = vmatpush1.msra.mxu0 %v980
    %982 = vmatprep.subr.mxu0 0.0
    %v983 = vand.u32 %v148, 4294901760
    %984 = vmatpush1.msra.mxu0 %v983
    %985 = vmatprep.subr.mxu0 0.0
    %v986 = vand.u32 %v149, 4294901760
    %987 = vmatpush1.msra.mxu0 %v986
    %988 = vmatprep.subr.mxu0 0.0
    %v989 = vand.u32 %v150, 4294901760
    %990 = vmatpush1.msra.mxu0 %v989
    %991 = vmatprep.subr.mxu0 0.0
    %v992 = vand.u32 %v151, 4294901760
    %993 = vmatpush1.msra.mxu0 %v992
    %994 = vmatprep.subr.mxu0 0.0
    %v995 = vand.u32 %v152, 4294901760
    %996 = vmatpush1.msra.mxu0 %v995
    %997 = vmatprep.subr.mxu0 0.0
    %v998 = vand.u32 %v153, 4294901760
    %999 = vmatpush1.msra.mxu0 %v998
    %1000 = vmatprep.subr.mxu0 0.0
    %v1001 = vand.u32 %v154, 4294901760
    %1002 = vmatpush1.msra.mxu0 %v1001
    %1003 = vmatprep.subr.mxu0 0.0
    %v1004 = vand.u32 %v155, 4294901760
    %1005 = vmatpush1.msra.mxu0 %v1004
    %1006 = vmatprep.subr.mxu0 0.0
    %v1007 = vand.u32 %v156, 4294901760
    %1008 = vmatpush1.msra.mxu0 %v1007
    %1009 = vmatprep.subr.mxu0 0.0
    %v1010 = vand.u32 %v157, 4294901760
    %1011 = vmatpush1.msra.mxu0 %v1010
    %v1012 = vand.u32 %v125, 4294901760
    %1013 = vmatprep.mubr.f32.mxu0 %v1012
    %v1014 = vand.u32 %v124, 4294901760
    %1015 = vmatmul.mubr.f32.gmra.mrb[0].mxu0 %v1014
    %v1016 = vpop.f32.mrb[0].mxu0
    %v1017 = vadd.f32 %v913, %v1016
    %v1018 = vpop.f32.mrb[0].mxu0
    %1019 = vdwg.mxu0
    %1020 = vst [vmem:[%s2] sm:$0xff] %v1017
    // Predicated region
    $region14: #{temporal_embedding.1} parent=1 // pred_check
      _
    $region15: #{temporal_embedding.1} parent=1 // pred_check_branch
      %1022 = sbr.rel (0) target = $region17
    $region16: #{temporal_embedding.1} parent=1 // pred_region
      _
    $region17: #{temporal_embedding.1} parent=1 // pred_fallthru
      _
    // Predicated region
    $region18: #{temporal_embedding.1} parent=1 // pred_check
      _
    $region19: #{temporal_embedding.1} parent=1 // pred_check_branch
      %1024 = sbr.rel (0) target = $region21
    $region20: #{temporal_embedding.1} parent=1 // pred_region
      _
    $region21: #{temporal_embedding.1} parent=1 // pred_fallthru
      _
    %1025 = vsyncpa [#allocation3], 1

</llo_original>
